<compile_context>
chip_gen: v5e
topology: v5e:2x2
jax: 0.10.0
libtpu: 0.0.40
codegen_flags: <defaults>
</compile_context>

<pallas_src>
import functools

import jax
import jax.numpy as jnp
from jax.experimental import pallas as pl
from jax.experimental.pallas import tpu as pltpu


# -----------------------------------------------------------------------------
# Kernel
# -----------------------------------------------------------------------------
def _ae_kernel(x_ref,
               w1, b1, w2, b2, w34, b34, w5, b5, w6, b6,
               o_ref, *, compute_dtype, approx_sigmoid):
    cdt = compute_dtype
    h = x_ref[...].astype(cdt)

    def dense_relu(h, w_ref, b_ref):
        a = jnp.dot(h, w_ref[...], preferred_element_type=jnp.float32) + b_ref[...]
        return jnp.maximum(a, 0.0).astype(cdt)

    # encoder (BN folded into the Linear weights on the host)
    h = dense_relu(h, w1, b1)            # 128 -> 64, BN+ReLU
    h = dense_relu(h, w2, b2)            # 64  -> 32, BN+ReLU
    # encoder Linear(32,16) and decoder Linear(16,32)+BN fused into one matmul
    h = dense_relu(h, w34, b34)          # 32  -> 32 (fused bottleneck), ReLU
    # decoder
    h = dense_relu(h, w5, b5)            # 32  -> 64, BN+ReLU
    logits = jnp.dot(h, w6[...], preferred_element_type=jnp.float32) + b6[...]

    # Sigmoid: exp on EUP; reciprocal via EUP (approx) on the bf16 path.
    denom = 1.0 + jnp.exp(-logits)
    out = pl.reciprocal(denom, approx=approx_sigmoid)
    o_ref[...] = out.astype(o_ref.dtype)


# -----------------------------------------------------------------------------
# Wrapper
# -----------------------------------------------------------------------------
def batchnorm_autoencoder_v2(x, folded_params, *, block_rows=512,
                             compute_dtype=jnp.float32):
    """x: (B, input_dim) float32.  folded_params: list from fold_params()."""
    B, F = x.shape

    # Batch-tile size: full batch if it already fits one tile, otherwise a
    # sublane-aligned tile (multiple of 8).
    if B <= block_rows:
        bt = B
    else:
        bt = max(8, (block_rows // 8) * 8)
    grid = (pl.cdiv(B, bt),)

    x_spec = pl.BlockSpec((bt, F), lambda i: (i, 0))
    out_spec = pl.BlockSpec((bt, F), lambda i: (i, 0))
    # Weights/biases: full-array blocks, constant index_map -> fetched once,
    # stay resident in VMEM across the batch grid.
    param_specs = [pl.BlockSpec(p.shape, lambda i: (0, 0)) for p in folded_params]

    kernel = functools.partial(
        _ae_kernel,
        compute_dtype=compute_dtype,
        approx_sigmoid=(compute_dtype == jnp.bfloat16),
    )

    return pl.pallas_call(
        kernel,
        out_shape=jax.ShapeDtypeStruct((B, F), jnp.float32),
        grid_spec=pltpu.PrefetchScalarGridSpec(
            num_scalar_prefetch=0,
            grid=grid,
            in_specs=[x_spec] + param_specs,
            out_specs=out_spec,
        ),
        compiler_params=pltpu.CompilerParams(
            dimension_semantics=("parallel",)),
    )(x, *folded_params)


# -----------------------------------------------------------------------------
# Parameter construction (PyTorch-equivalent init) and host-side folding
# -----------------------------------------------------------------------------
def _init_linear(key, in_dim, out_dim):
    # nn.Linear default init: U(-1/sqrt(in), 1/sqrt(in)).  Weight stored as
    # (in, out) so the kernel computes h @ W + b.
    kw, kb = jax.random.split(key)
    bound = 1.0 / jnp.sqrt(jnp.float32(in_dim))
    w = jax.random.uniform(kw, (in_dim, out_dim), jnp.float32, -bound, bound)
    b = jax.random.uniform(kb, (1, out_dim), jnp.float32, -bound, bound)
    return w, b


def _init_bn_state(key, dim):
    # Randomized (as-if-trained) BatchNorm1d state so the BN fold is exercised.
    k1, k2, k3, k4 = jax.random.split(key, 4)
    gamma = jax.random.uniform(k1, (1, dim), jnp.float32, 0.5, 1.5)
    beta = 0.1 * jax.random.normal(k2, (1, dim), jnp.float32)
    running_mean = 0.5 * jax.random.normal(k3, (1, dim), jnp.float32)
    running_var = jax.random.uniform(k4, (1, dim), jnp.float32, 0.5, 1.5)
    return gamma, beta, running_mean, running_var


def init_params(key, input_dim=128, hidden_dims=(64, 32), latent_dim=16):
    h1, h2 = hidden_dims
    ks = jax.random.split(key, 10)
    p = {}
    p["w1"], p["b1"] = _init_linear(ks[0], input_dim, h1)
    p["bn1"] = _init_bn_state(ks[1], h1)
    p["w2"], p["b2"] = _init_linear(ks[2], h1, h2)
    p["bn2"] = _init_bn_state(ks[3], h2)
    p["w3"], p["b3"] = _init_linear(ks[4], h2, latent_dim)
    p["w4"], p["b4"] = _init_linear(ks[5], latent_dim, h2)
    p["bn4"] = _init_bn_state(ks[6], h2)
    p["w5"], p["b5"] = _init_linear(ks[7], h2, h1)
    p["bn5"] = _init_bn_state(ks[8], h1)
    p["w6"], p["b6"] = _init_linear(ks[9], h1, input_dim)
    return p


def _fold_bn_into_linear(w, b, bn, eps=1e-5):
    gamma, beta, mean, var = bn
    scale = gamma / jnp.sqrt(var + eps)          # (1, out)
    return w * scale, b * scale + (beta - mean * scale)


def fold_params(p, eps=1e-5, compute_dtype=jnp.float32):
    """Fold eval-mode BN into the preceding Linears and fuse the 32->16->32
    bottleneck into one 32->32 Linear.  Weights cast to compute_dtype (e.g.
    bf16 for MXU-native matmuls); biases stay f32 (added to the f32 acc)."""
    w1, b1 = _fold_bn_into_linear(p["w1"], p["b1"], p["bn1"], eps)
    w2, b2 = _fold_bn_into_linear(p["w2"], p["b2"], p["bn2"], eps)
    w4, b4 = _fold_bn_into_linear(p["w4"], p["b4"], p["bn4"], eps)
    w5, b5 = _fold_bn_into_linear(p["w5"], p["b5"], p["bn5"], eps)
    # No nonlinearity between encoder Linear(32,16) and decoder Linear(16,32):
    # fuse into a single 32->32 matmul.
    w34 = p["w3"] @ w4
    b34 = p["b3"] @ w4 + b4
    w6, b6 = p["w6"], p["b6"]

    out = []
    for w, b in [(w1, b1), (w2, b2), (w34, b34), (w5, b5), (w6, b6)]:
        out.append(w.astype(compute_dtype))
        out.append(b.astype(jnp.float32))
    return out


# -----------------------------------------------------------------------------
# Pure-JAX reference (layer-by-layer, unfused, eval-mode PyTorch semantics)
# -----------------------------------------------------------------------------
def reference_forward(x, p, eps=1e-5):
    def bn(h, bnp):
        gamma, beta, mean, var = bnp
        return (h - mean) / jnp.sqrt(var + eps) * gamma + beta

    h = jnp.maximum(bn(x @ p["w1"] + p["b1"], p["bn1"]), 0.0)
    h = jnp.maximum(bn(h @ p["w2"] + p["b2"], p["bn2"]), 0.0)
    z = h @ p["w3"] + p["b3"]                       # latent
    h = jnp.maximum(bn(z @ p["w4"] + p["b4"], p["bn4"]), 0.0)
    h = jnp.maximum(bn(h @ p["w5"] + p["b5"], p["bn5"]), 0.0)
    h = h @ p["w6"] + p["b6"]
    return jax.nn.sigmoid(h)


# -----------------------------------------------------------------------------
# Test
# -----------------------------------------------------------------------------
if __name__ == "__main__":
    key = jax.random.PRNGKey(0)
    kx, kp = jax.random.split(key)

    B, INPUT_DIM = 256, 128
    x = jax.random.normal(kx, (B, INPUT_DIM), jnp.float32)
    raw = init_params(kp, input_dim=INPUT_DIM, hidden_dims=(64, 32),
                      latent_dim=16)
    ref = reference_forward(x, raw)

    # ---- f32 path: small batch tile to exercise the multi-step grid pipeline
    p_f32 = fold_params(raw, compute_dtype=jnp.float32)
    out_f32 = jax.block_until_ready(
        batchnorm_autoencoder_v2(x, p_f32, block_rows=64,
                                 compute_dtype=jnp.float32))
    assert out_f32.shape == (B, INPUT_DIM)
    assert jnp.allclose(out_f32, ref, atol=1e-4, rtol=1e-4), \
        float(jnp.max(jnp.abs(out_f32 - ref)))

    # ---- bf16 matmul path (MXU-native), relaxed tolerance vs f32 reference
    p_bf16 = fold_params(raw, compute_dtype=jnp.bfloat16)
    out_bf16 = jax.block_until_ready(
        batchnorm_autoencoder_v2(x, p_bf16, block_rows=64,
                                 compute_dtype=jnp.bfloat16))
    assert out_bf16.shape == (B, INPUT_DIM)
    assert float(jnp.max(jnp.abs(out_bf16 - ref))) < 5e-2

    print("KERNEL_OK")
</pallas_src>

<mosaic_0001>
module attributes {stable_mosaic.version = 11 : i64} {
  func.func @_ae_kernel(%arg0: i32, %arg1: memref<64x128xf32, #tpu.memory_space<vmem>>, %arg2: memref<128x64xf32, #tpu.memory_space<vmem>>, %arg3: memref<1x64xf32, #tpu.memory_space<vmem>>, %arg4: memref<64x32xf32, #tpu.memory_space<vmem>>, %arg5: memref<1x32xf32, #tpu.memory_space<vmem>>, %arg6: memref<32x32xf32, #tpu.memory_space<vmem>>, %arg7: memref<1x32xf32, #tpu.memory_space<vmem>>, %arg8: memref<32x64xf32, #tpu.memory_space<vmem>>, %arg9: memref<1x64xf32, #tpu.memory_space<vmem>>, %arg10: memref<64x128xf32, #tpu.memory_space<vmem>>, %arg11: memref<1x128xf32, #tpu.memory_space<vmem>>, %arg12: memref<64x128xf32, #tpu.memory_space<vmem>>) attributes {dimension_semantics = [#tpu.dimension_semantics<parallel>], iteration_bounds = array<i64: 4>, scalar_prefetch = 0 : i64, scratch_operands = 0 : i64, tpu.core_type = #tpu.core_type<tc>, window_params = [{transform_indices = @transform_0, window_bounds = array<i64: 64, 128>}, {pipeline_mode = #tpu.pipeline_mode<synchronous>, transform_indices = @transform_1, window_bounds = array<i64: 128, 64>}, {pipeline_mode = #tpu.pipeline_mode<synchronous>, transform_indices = @transform_2, window_bounds = array<i64: 1, 64>}, {pipeline_mode = #tpu.pipeline_mode<synchronous>, transform_indices = @transform_3, window_bounds = array<i64: 64, 32>}, {pipeline_mode = #tpu.pipeline_mode<synchronous>, transform_indices = @transform_4, window_bounds = array<i64: 1, 32>}, {pipeline_mode = #tpu.pipeline_mode<synchronous>, transform_indices = @transform_5, window_bounds = array<i64: 32, 32>}, {pipeline_mode = #tpu.pipeline_mode<synchronous>, transform_indices = @transform_6, window_bounds = array<i64: 1, 32>}, {pipeline_mode = #tpu.pipeline_mode<synchronous>, transform_indices = @transform_7, window_bounds = array<i64: 32, 64>}, {pipeline_mode = #tpu.pipeline_mode<synchronous>, transform_indices = @transform_8, window_bounds = array<i64: 1, 64>}, {pipeline_mode = #tpu.pipeline_mode<synchronous>, transform_indices = @transform_9, window_bounds = array<i64: 64, 128>}, {pipeline_mode = #tpu.pipeline_mode<synchronous>, transform_indices = @transform_10, window_bounds = array<i64: 1, 128>}, {transform_indices = @transform_11, window_bounds = array<i64: 64, 128>}]} {
    %c0 = arith.constant 0 : index
    %c0_0 = arith.constant 0 : index
    %0 = vector.load %arg1[%c0, %c0_0] : memref<64x128xf32, #tpu.memory_space<vmem>>, vector<64x128xf32>
    %c0_1 = arith.constant 0 : index
    %c0_2 = arith.constant 0 : index
    %1 = vector.load %arg2[%c0_1, %c0_2] : memref<128x64xf32, #tpu.memory_space<vmem>>, vector<128x64xf32>
    %cst = arith.constant dense<0.000000e+00> : vector<64x64xf32>
    %2 = tpu.matmul %0, %1, %cst {dimension_numbers = #tpu.dot_dimension_numbers<[1], [0], [0], [1], [0, 0, 1, 1], [], []>} : vector<64x128xf32>, vector<128x64xf32>, vector<64x64xf32> -> vector<64x64xf32>
    %c0_3 = arith.constant 0 : index
    %c0_4 = arith.constant 0 : index
    %3 = vector.load %arg3[%c0_3, %c0_4] : memref<1x64xf32, #tpu.memory_space<vmem>>, vector<1x64xf32>
    %4 = vector.broadcast %3 : vector<1x64xf32> to vector<64x64xf32>
    %5 = arith.addf %2, %4 : vector<64x64xf32>
    %cst_5 = arith.constant 0.000000e+00 : f32
    %6 = vector.broadcast %cst_5 : f32 to vector<64x64xf32>
    %7 = arith.maximumf %5, %6 : vector<64x64xf32>
    %c0_6 = arith.constant 0 : index
    %c0_7 = arith.constant 0 : index
    %8 = vector.load %arg4[%c0_6, %c0_7] : memref<64x32xf32, #tpu.memory_space<vmem>>, vector<64x32xf32>
    %cst_8 = arith.constant dense<0.000000e+00> : vector<64x32xf32>
    %9 = tpu.matmul %7, %8, %cst_8 {dimension_numbers = #tpu.dot_dimension_numbers<[1], [0], [0], [1], [0, 0, 1, 1], [], []>} : vector<64x64xf32>, vector<64x32xf32>, vector<64x32xf32> -> vector<64x32xf32>
    %c0_9 = arith.constant 0 : index
    %c0_10 = arith.constant 0 : index
    %10 = vector.load %arg5[%c0_9, %c0_10] : memref<1x32xf32, #tpu.memory_space<vmem>>, vector<1x32xf32>
    %11 = vector.broadcast %10 : vector<1x32xf32> to vector<64x32xf32>
    %12 = arith.addf %9, %11 : vector<64x32xf32>
    %cst_11 = arith.constant 0.000000e+00 : f32
    %13 = vector.broadcast %cst_11 : f32 to vector<64x32xf32>
    %14 = arith.maximumf %12, %13 : vector<64x32xf32>
    %c0_12 = arith.constant 0 : index
    %c0_13 = arith.constant 0 : index
    %15 = vector.load %arg6[%c0_12, %c0_13] : memref<32x32xf32, #tpu.memory_space<vmem>>, vector<32x32xf32>
    %cst_14 = arith.constant dense<0.000000e+00> : vector<64x32xf32>
    %16 = tpu.matmul %14, %15, %cst_14 {dimension_numbers = #tpu.dot_dimension_numbers<[1], [0], [0], [1], [0, 0, 1, 1], [], []>} : vector<64x32xf32>, vector<32x32xf32>, vector<64x32xf32> -> vector<64x32xf32>
    %c0_15 = arith.constant 0 : index
    %c0_16 = arith.constant 0 : index
    %17 = vector.load %arg7[%c0_15, %c0_16] : memref<1x32xf32, #tpu.memory_space<vmem>>, vector<1x32xf32>
    %18 = vector.broadcast %17 : vector<1x32xf32> to vector<64x32xf32>
    %19 = arith.addf %16, %18 : vector<64x32xf32>
    %cst_17 = arith.constant 0.000000e+00 : f32
    %20 = vector.broadcast %cst_17 : f32 to vector<64x32xf32>
    %21 = arith.maximumf %19, %20 : vector<64x32xf32>
    %c0_18 = arith.constant 0 : index
    %c0_19 = arith.constant 0 : index
    %22 = vector.load %arg8[%c0_18, %c0_19] : memref<32x64xf32, #tpu.memory_space<vmem>>, vector<32x64xf32>
    %cst_20 = arith.constant dense<0.000000e+00> : vector<64x64xf32>
    %23 = tpu.matmul %21, %22, %cst_20 {dimension_numbers = #tpu.dot_dimension_numbers<[1], [0], [0], [1], [0, 0, 1, 1], [], []>} : vector<64x32xf32>, vector<32x64xf32>, vector<64x64xf32> -> vector<64x64xf32>
    %c0_21 = arith.constant 0 : index
    %c0_22 = arith.constant 0 : index
    %24 = vector.load %arg9[%c0_21, %c0_22] : memref<1x64xf32, #tpu.memory_space<vmem>>, vector<1x64xf32>
    %25 = vector.broadcast %24 : vector<1x64xf32> to vector<64x64xf32>
    %26 = arith.addf %23, %25 : vector<64x64xf32>
    %cst_23 = arith.constant 0.000000e+00 : f32
    %27 = vector.broadcast %cst_23 : f32 to vector<64x64xf32>
    %28 = arith.maximumf %26, %27 : vector<64x64xf32>
    %c0_24 = arith.constant 0 : index
    %c0_25 = arith.constant 0 : index
    %29 = vector.load %arg10[%c0_24, %c0_25] : memref<64x128xf32, #tpu.memory_space<vmem>>, vector<64x128xf32>
    %cst_26 = arith.constant dense<0.000000e+00> : vector<64x128xf32>
    %30 = tpu.matmul %28, %29, %cst_26 {dimension_numbers = #tpu.dot_dimension_numbers<[1], [0], [0], [1], [0, 0, 1, 1], [], []>} : vector<64x64xf32>, vector<64x128xf32>, vector<64x128xf32> -> vector<64x128xf32>
    %c0_27 = arith.constant 0 : index
    %c0_28 = arith.constant 0 : index
    %31 = vector.load %arg11[%c0_27, %c0_28] : memref<1x128xf32, #tpu.memory_space<vmem>>, vector<1x128xf32>
    %32 = vector.broadcast %31 : vector<1x128xf32> to vector<64x128xf32>
    %33 = arith.addf %30, %32 : vector<64x128xf32>
    %cst_29 = arith.constant 0.000000e+00 : f32
    %34 = vector.broadcast %cst_29 : f32 to vector<64x128xf32>
    %35 = arith.subf %34, %33 : vector<64x128xf32>
    %36 = math.exp %35 : vector<64x128xf32>
    %cst_30 = arith.constant 1.000000e+00 : f32
    %37 = vector.broadcast %cst_30 : f32 to vector<64x128xf32>
    %38 = arith.addf %37, %36 : vector<64x128xf32>
    %39 = tpu.reciprocal %38 : vector<64x128xf32> -> vector<64x128xf32>
    %c0_31 = arith.constant 0 : index
    %c0_32 = arith.constant 0 : index
    %40 = vector.load %arg12[%c0_31, %c0_32] : memref<64x128xf32, #tpu.memory_space<vmem>>, vector<64x128xf32>
    tpu.vector_store %arg12[%c0_31, %c0_32], %39 {strides = array<i32>} : memref<64x128xf32, #tpu.memory_space<vmem>>, vector<64x128xf32>,
    return
  }
  func.func @transform_0(%arg0: i32) -> (i32, i32) {
    %c0_i32 = arith.constant 0 : i32
    %c0_i32_0 = arith.constant 0 : i32
    return %arg0, %c0_i32 : i32, i32
  }
  func.func @transform_1(%arg0: i32) -> (i32, i32) {
    %c0_i32 = arith.constant 0 : i32
    %c0_i32_0 = arith.constant 0 : i32
    %c0_i32_1 = arith.constant 0 : i32
    return %c0_i32, %c0_i32_0 : i32, i32
  }
  func.func @transform_2(%arg0: i32) -> (i32, i32) {
    %c0_i32 = arith.constant 0 : i32
    %c0_i32_0 = arith.constant 0 : i32
    %c0_i32_1 = arith.constant 0 : i32
    return %c0_i32, %c0_i32_0 : i32, i32
  }
  func.func @transform_3(%arg0: i32) -> (i32, i32) {
    %c0_i32 = arith.constant 0 : i32
    %c0_i32_0 = arith.constant 0 : i32
    %c0_i32_1 = arith.constant 0 : i32
    return %c0_i32, %c0_i32_0 : i32, i32
  }
  func.func @transform_4(%arg0: i32) -> (i32, i32) {
    %c0_i32 = arith.constant 0 : i32
    %c0_i32_0 = arith.constant 0 : i32
    %c0_i32_1 = arith.constant 0 : i32
    return %c0_i32, %c0_i32_0 : i32, i32
  }
  func.func @transform_5(%arg0: i32) -> (i32, i32) {
    %c0_i32 = arith.constant 0 : i32
    %c0_i32_0 = arith.constant 0 : i32
    %c0_i32_1 = arith.constant 0 : i32
    return %c0_i32, %c0_i32_0 : i32, i32
  }
  func.func @transform_6(%arg0: i32) -> (i32, i32) {
    %c0_i32 = arith.constant 0 : i32
    %c0_i32_0 = arith.constant 0 : i32
    %c0_i32_1 = arith.constant 0 : i32
    return %c0_i32, %c0_i32_0 : i32, i32
  }
  func.func @transform_7(%arg0: i32) -> (i32, i32) {
    %c0_i32 = arith.constant 0 : i32
    %c0_i32_0 = arith.constant 0 : i32
    %c0_i32_1 = arith.constant 0 : i32
    return %c0_i32, %c0_i32_0 : i32, i32
  }
  func.func @transform_8(%arg0: i32) -> (i32, i32) {
    %c0_i32 = arith.constant 0 : i32
    %c0_i32_0 = arith.constant 0 : i32
    %c0_i32_1 = arith.constant 0 : i32
    return %c0_i32, %c0_i32_0 : i32, i32
  }
  func.func @transform_9(%arg0: i32) -> (i32, i32) {
    %c0_i32 = arith.constant 0 : i32
    %c0_i32_0 = arith.constant 0 : i32
    %c0_i32_1 = arith.constant 0 : i32
    return %c0_i32, %c0_i32_0 : i32, i32
  }
  func.func @transform_10(%arg0: i32) -> (i32, i32) {
    %c0_i32 = arith.constant 0 : i32
    %c0_i32_0 = arith.constant 0 : i32
    %c0_i32_1 = arith.constant 0 : i32
    return %c0_i32, %c0_i32_0 : i32, i32
  }
  func.func @transform_11(%arg0: i32) -> (i32, i32) {
    %c0_i32 = arith.constant 0 : i32
    %c0_i32_0 = arith.constant 0 : i32
    return %arg0, %c0_i32 : i32, i32
  }
}

</mosaic_0001>

<llo_original>
// kernel: tpu_custom_call.1
$region0: #{tpu_custom_call.1}
  #allocation0 [shape = 'u32[]', space=smem, size = 0x4, offset = 0x4, fixed_abs, tag = 'smem constant byte address 0x4 - core index']
  #allocation1 [shape = 'u32[72,128]{1,0:T(1,128)}', space=vmem, size = 0x9000, scoped, tag = 'internal scratch']
  %s0 = inlined_call_operand.hbm [shape: f32[256,128], index: 0, kind: input, shape index: {}]
  %s1 = inlined_call_operand.vmem [shape: f32[128,64], index: 1, kind: input, shape index: {}]
  %s2 = inlined_call_operand.vmem [shape: f32[1,64], index: 2, kind: input, shape index: {}]
  %s3 = inlined_call_operand.vmem [shape: f32[64,32], index: 3, kind: input, shape index: {}]
  %s4 = inlined_call_operand.vmem [shape: f32[1,32], index: 4, kind: input, shape index: {}]
  %s5 = inlined_call_operand.vmem [shape: f32[32,32], index: 5, kind: input, shape index: {}]
  %s6 = inlined_call_operand.vmem [shape: f32[1,32], index: 6, kind: input, shape index: {}]
  %s7 = inlined_call_operand.vmem [shape: f32[32,64], index: 7, kind: input, shape index: {}]
  %s8 = inlined_call_operand.vmem [shape: f32[1,64], index: 8, kind: input, shape index: {}]
  %s9 = inlined_call_operand.vmem [shape: f32[64,128], index: 9, kind: input, shape index: {}]
  %s10 = inlined_call_operand.vmem [shape: f32[1,128], index: 10, kind: input, shape index: {}]
  %s11 = inlined_call_operand.hbm [shape: f32[256,128], index: 11, kind: output, shape index: {}]
  %s12 = sld [smem:[#allocation0]]
  $region81: #{tpu_custom_call.1} parent=0
    _
  %s14 = ssub.s32 1, %s12
  %s15 = scalar_select 0, %s14, %s12
  $region1: #{tpu_custom_call.1} parent=0
    #allocation2 [shape = 'u8[65536]{0}', space=vmem, size = 0x10000, scoped, tag = 'input window, operand 0']
    #allocation3 [shape = 's32[2]{0}', space=sflag, size = 0x8, scoped, tag = 'scoped memory for tpu_custom_call.1']
    #allocation4 [shape = 's32[2]{0}', space=sflag, size = 0x8, scoped, tag = 'scoped memory for tpu_custom_call.1']
    #allocation5 [shape = 'u8[65536]{0}', space=vmem, size = 0x10000, scoped, tag = 'output window, operand 0']
    %16 = vsyncpa [#allocation3], 0
    %s17 = scalar_lea.sflag [#allocation3], 1
    %18 = vsyncpa %s17, 0
    %19 = vsyncpa [#allocation4], 0
    %s20 = scalar_lea.sflag [#allocation4], 1
    %21 = vsyncpa %s20, 0
    loop: start=0, step=1, limit=6
    $region2: #{tpu_custom_call.1} parent=1 // loop_pre_header
      _
    $region3: #{tpu_custom_call.1} parent=1 // loop_header
      %s23 = sphi 0, %s27
      %p24 = scmp.ge.s32.totalorder %s23, 6
      %s33 = sphi 0, %s35
      %s36 = sphi 0, %s33
      %s37 = sphi 0, %s36
      %s53 = sphi 0, %s37
      %s57 = sphi 0, %s57
      %s59 = sphi 0, %s57
      %s60 = sphi 0, %s59
      %s74 = sphi 0, %s60
      %s78 = sphi 0, %s78
      %s80 = sphi 0, %s78
      %s81 = sphi 0, %s80
      %s95 = sphi 0, %s81
      %s99 = sphi 0, %s99
      %s101 = sphi 0, %s99
      %s102 = sphi 0, %s101
      %s116 = sphi 0, %s102
      %s120 = sphi 0, %s120
      %s122 = sphi 0, %s120
      %s123 = sphi 0, %s122
      %s137 = sphi 0, %s123
      %s141 = sphi 0, %s141
      %s143 = sphi 0, %s141
      %s144 = sphi 0, %s143
      %s158 = sphi 0, %s144
      %s162 = sphi 0, %s162
      %s164 = sphi 0, %s162
      %s165 = sphi 0, %s164
      %s179 = sphi 0, %s165
      %s183 = sphi 0, %s183
      %s185 = sphi 0, %s183
      %s186 = sphi 0, %s185
      %s200 = sphi 0, %s186
      %s204 = sphi 0, %s204
      %s206 = sphi 0, %s204
      %s207 = sphi 0, %s206
      %s221 = sphi 0, %s207
      %s225 = sphi 0, %s225
      %s227 = sphi 0, %s225
      %s228 = sphi 0, %s227
      %s242 = sphi 0, %s228
      %s246 = sphi 0, %s246
      %s248 = sphi 0, %s246
      %s249 = sphi 0, %s248
      %s263 = sphi 0, %s249
      %s269 = sphi 0, %s271
      %s272 = sphi 0, %s269
      %s273 = sphi 0, %s272
      %s289 = sphi 0, %s273
    $region4: #{tpu_custom_call.1} parent=1 // loop_header_branch
      %26 = sbr.rel (%p24) target = $region8
    $region5: #{tpu_custom_call.1} parent=1 // loop_body
      %s28 = ssub.s32 %s23, 1
      %s29 = ssub.s32 %s23, 2
      %s30 = sadd.s32 %s23, 1
      %s31 = ssub.s32 %s23, %s30
      %p32 = scmp.eq.s32.totalorder %s31, 0
      %s34 = sadd.s32 %s33, 1
      %s35 = scalar_select %p32, %s33, %s34
      %p38 = pneg %p32
      %p39 = scmp.eq.s32.totalorder %s23, 3
      %p40 = por %p38, %p39
      %p41 = scmp.ne.s32.totalorder %s33, %s36
      %p42 = scmp.eq.s32.totalorder %s23, 0
      %p43 = por %p41, %p42
      %p44 = scmp.ne.s32.totalorder %s33, %s36
      %p45 = scmp.eq.s32.totalorder %s28, 3
      %p46 = por %p44, %p45
      %p47 = scmp.ne.s32.totalorder %s36, %s37
      %p48 = scmp.eq.s32.totalorder %s28, 0
      %p49 = por %p47, %p48
      %p50 = scmp.ne.s32.totalorder %s36, %s37
      %p51 = scmp.eq.s32.totalorder %s29, 3
      %p52 = por %p50, %p51
      %p54 = scmp.ne.s32.totalorder %s37, %s53
      %p55 = scmp.eq.s32.totalorder %s29, 0
      %p56 = por %p54, %p55
      %s58 = sadd.s32 %s57, 1
      %p61 = scmp.eq.s32.totalorder %s23, 3
      %p62 = scmp.ne.s32.totalorder %s57, %s59
      %p63 = scmp.eq.s32.totalorder %s23, 0
      %p64 = por %p62, %p63
      %p65 = scmp.ne.s32.totalorder %s57, %s59
      %p66 = scmp.eq.s32.totalorder %s28, 3
      %p67 = por %p65, %p66
      %p68 = scmp.ne.s32.totalorder %s59, %s60
      %p69 = scmp.eq.s32.totalorder %s28, 0
      %p70 = por %p68, %p69
      %p71 = scmp.ne.s32.totalorder %s59, %s60
      %p72 = scmp.eq.s32.totalorder %s29, 3
      %p73 = por %p71, %p72
      %p75 = scmp.ne.s32.totalorder %s60, %s74
      %p76 = scmp.eq.s32.totalorder %s29, 0
      %p77 = por %p75, %p76
      %s79 = sadd.s32 %s78, 1
      %p82 = scmp.eq.s32.totalorder %s23, 3
      %p83 = scmp.ne.s32.totalorder %s78, %s80
      %p84 = scmp.eq.s32.totalorder %s23, 0
      %p85 = por %p83, %p84
      %p86 = scmp.ne.s32.totalorder %s78, %s80
      %p87 = scmp.eq.s32.totalorder %s28, 3
      %p88 = por %p86, %p87
      %p89 = scmp.ne.s32.totalorder %s80, %s81
      %p90 = scmp.eq.s32.totalorder %s28, 0
      %p91 = por %p89, %p90
      %p92 = scmp.ne.s32.totalorder %s80, %s81
      %p93 = scmp.eq.s32.totalorder %s29, 3
      %p94 = por %p92, %p93
      %p96 = scmp.ne.s32.totalorder %s81, %s95
      %p97 = scmp.eq.s32.totalorder %s29, 0
      %p98 = por %p96, %p97
      %s100 = sadd.s32 %s99, 1
      %p103 = scmp.eq.s32.totalorder %s23, 3
      %p104 = scmp.ne.s32.totalorder %s99, %s101
      %p105 = scmp.eq.s32.totalorder %s23, 0
      %p106 = por %p104, %p105
      %p107 = scmp.ne.s32.totalorder %s99, %s101
      %p108 = scmp.eq.s32.totalorder %s28, 3
      %p109 = por %p107, %p108
      %p110 = scmp.ne.s32.totalorder %s101, %s102
      %p111 = scmp.eq.s32.totalorder %s28, 0
      %p112 = por %p110, %p111
      %p113 = scmp.ne.s32.totalorder %s101, %s102
      %p114 = scmp.eq.s32.totalorder %s29, 3
      %p115 = por %p113, %p114
      %p117 = scmp.ne.s32.totalorder %s102, %s116
      %p118 = scmp.eq.s32.totalorder %s29, 0
      %p119 = por %p117, %p118
      %s121 = sadd.s32 %s120, 1
      %p124 = scmp.eq.s32.totalorder %s23, 3
      %p125 = scmp.ne.s32.totalorder %s120, %s122
      %p126 = scmp.eq.s32.totalorder %s23, 0
      %p127 = por %p125, %p126
      %p128 = scmp.ne.s32.totalorder %s120, %s122
      %p129 = scmp.eq.s32.totalorder %s28, 3
      %p130 = por %p128, %p129
      %p131 = scmp.ne.s32.totalorder %s122, %s123
      %p132 = scmp.eq.s32.totalorder %s28, 0
      %p133 = por %p131, %p132
      %p134 = scmp.ne.s32.totalorder %s122, %s123
      %p135 = scmp.eq.s32.totalorder %s29, 3
      %p136 = por %p134, %p135
      %p138 = scmp.ne.s32.totalorder %s123, %s137
      %p139 = scmp.eq.s32.totalorder %s29, 0
      %p140 = por %p138, %p139
      %s142 = sadd.s32 %s141, 1
      %p145 = scmp.eq.s32.totalorder %s23, 3
      %p146 = scmp.ne.s32.totalorder %s141, %s143
      %p147 = scmp.eq.s32.totalorder %s23, 0
      %p148 = por %p146, %p147
      %p149 = scmp.ne.s32.totalorder %s141, %s143
      %p150 = scmp.eq.s32.totalorder %s28, 3
      %p151 = por %p149, %p150
      %p152 = scmp.ne.s32.totalorder %s143, %s144
      %p153 = scmp.eq.s32.totalorder %s28, 0
      %p154 = por %p152, %p153
      %p155 = scmp.ne.s32.totalorder %s143, %s144
      %p156 = scmp.eq.s32.totalorder %s29, 3
      %p157 = por %p155, %p156
      %p159 = scmp.ne.s32.totalorder %s144, %s158
      %p160 = scmp.eq.s32.totalorder %s29, 0
      %p161 = por %p159, %p160
      %s163 = sadd.s32 %s162, 1
      %p166 = scmp.eq.s32.totalorder %s23, 3
      %p167 = scmp.ne.s32.totalorder %s162, %s164
      %p168 = scmp.eq.s32.totalorder %s23, 0
      %p169 = por %p167, %p168
      %p170 = scmp.ne.s32.totalorder %s162, %s164
      %p171 = scmp.eq.s32.totalorder %s28, 3
      %p172 = por %p170, %p171
      %p173 = scmp.ne.s32.totalorder %s164, %s165
      %p174 = scmp.eq.s32.totalorder %s28, 0
      %p175 = por %p173, %p174
      %p176 = scmp.ne.s32.totalorder %s164, %s165
      %p177 = scmp.eq.s32.totalorder %s29, 3
      %p178 = por %p176, %p177
      %p180 = scmp.ne.s32.totalorder %s165, %s179
      %p181 = scmp.eq.s32.totalorder %s29, 0
      %p182 = por %p180, %p181
      %s184 = sadd.s32 %s183, 1
      %p187 = scmp.eq.s32.totalorder %s23, 3
      %p188 = scmp.ne.s32.totalorder %s183, %s185
      %p189 = scmp.eq.s32.totalorder %s23, 0
      %p190 = por %p188, %p189
      %p191 = scmp.ne.s32.totalorder %s183, %s185
      %p192 = scmp.eq.s32.totalorder %s28, 3
      %p193 = por %p191, %p192
      %p194 = scmp.ne.s32.totalorder %s185, %s186
      %p195 = scmp.eq.s32.totalorder %s28, 0
      %p196 = por %p194, %p195
      %p197 = scmp.ne.s32.totalorder %s185, %s186
      %p198 = scmp.eq.s32.totalorder %s29, 3
      %p199 = por %p197, %p198
      %p201 = scmp.ne.s32.totalorder %s186, %s200
      %p202 = scmp.eq.s32.totalorder %s29, 0
      %p203 = por %p201, %p202
      %s205 = sadd.s32 %s204, 1
      %p208 = scmp.eq.s32.totalorder %s23, 3
      %p209 = scmp.ne.s32.totalorder %s204, %s206
      %p210 = scmp.eq.s32.totalorder %s23, 0
      %p211 = por %p209, %p210
      %p212 = scmp.ne.s32.totalorder %s204, %s206
      %p213 = scmp.eq.s32.totalorder %s28, 3
      %p214 = por %p212, %p213
      %p215 = scmp.ne.s32.totalorder %s206, %s207
      %p216 = scmp.eq.s32.totalorder %s28, 0
      %p217 = por %p215, %p216
      %p218 = scmp.ne.s32.totalorder %s206, %s207
      %p219 = scmp.eq.s32.totalorder %s29, 3
      %p220 = por %p218, %p219
      %p222 = scmp.ne.s32.totalorder %s207, %s221
      %p223 = scmp.eq.s32.totalorder %s29, 0
      %p224 = por %p222, %p223
      %s226 = sadd.s32 %s225, 1
      %p229 = scmp.eq.s32.totalorder %s23, 3
      %p230 = scmp.ne.s32.totalorder %s225, %s227
      %p231 = scmp.eq.s32.totalorder %s23, 0
      %p232 = por %p230, %p231
      %p233 = scmp.ne.s32.totalorder %s225, %s227
      %p234 = scmp.eq.s32.totalorder %s28, 3
      %p235 = por %p233, %p234
      %p236 = scmp.ne.s32.totalorder %s227, %s228
      %p237 = scmp.eq.s32.totalorder %s28, 0
      %p238 = por %p236, %p237
      %p239 = scmp.ne.s32.totalorder %s227, %s228
      %p240 = scmp.eq.s32.totalorder %s29, 3
      %p241 = por %p239, %p240
      %p243 = scmp.ne.s32.totalorder %s228, %s242
      %p244 = scmp.eq.s32.totalorder %s29, 0
      %p245 = por %p243, %p244
      %s247 = sadd.s32 %s246, 1
      %p250 = scmp.eq.s32.totalorder %s23, 3
      %p251 = scmp.ne.s32.totalorder %s246, %s248
      %p252 = scmp.eq.s32.totalorder %s23, 0
      %p253 = por %p251, %p252
      %p254 = scmp.ne.s32.totalorder %s246, %s248
      %p255 = scmp.eq.s32.totalorder %s28, 3
      %p256 = por %p254, %p255
      %p257 = scmp.ne.s32.totalorder %s248, %s249
      %p258 = scmp.eq.s32.totalorder %s28, 0
      %p259 = por %p257, %p258
      %p260 = scmp.ne.s32.totalorder %s248, %s249
      %p261 = scmp.eq.s32.totalorder %s29, 3
      %p262 = por %p260, %p261
      %p264 = scmp.ne.s32.totalorder %s249, %s263
      %p265 = scmp.eq.s32.totalorder %s29, 0
      %p266 = por %p264, %p265
      %s267 = ssub.s32 %s23, %s30
      %p268 = scmp.eq.s32.totalorder %s267, 0
      %s270 = sadd.s32 %s269, 1
      %s271 = scalar_select %p268, %s269, %s270
      %p274 = pneg %p268
      %p275 = scmp.eq.s32.totalorder %s23, 3
      %p276 = por %p274, %p275
      %p277 = scmp.ne.s32.totalorder %s269, %s272
      %p278 = scmp.eq.s32.totalorder %s23, 0
      %p279 = por %p277, %p278
      %p280 = scmp.ne.s32.totalorder %s269, %s272
      %p281 = scmp.eq.s32.totalorder %s28, 3
      %p282 = por %p280, %p281
      %p283 = scmp.ne.s32.totalorder %s272, %s273
      %p284 = scmp.eq.s32.totalorder %s28, 0
      %p285 = por %p283, %p284
      %p286 = scmp.ne.s32.totalorder %s272, %s273
      %p287 = scmp.eq.s32.totalorder %s29, 3
      %p288 = por %p286, %p287
      %p290 = scmp.ne.s32.totalorder %s273, %s289
      %p291 = scmp.eq.s32.totalorder %s29, 0
      %p292 = por %p290, %p291
      %p293 = scmp.le.s32.totalorder 1, %s23
      %p294 = scmp.lt.s32.totalorder %s23, 5
      %p295 = pnand %p293, %p294
      %p296 = pneg %p295
      // Predicated region
      $region9: #{tpu_custom_call.1} parent=5 // pred_check
        _
      $region10: #{tpu_custom_call.1} parent=5 // pred_check_branch
        %298 = sbr.rel (%p295) target = $region12
      $region11: #{tpu_custom_call.1} parent=5 // pred_region
        %s299 = ssub.s32 %s23, 1
        // Predicated region
        $region13: #{tpu_custom_call.1} parent=11 // pred_check
          %p300 = pneg %p70
        $region14: #{tpu_custom_call.1} parent=11 // pred_check_branch
          %302 = sbr.rel (%p300) target = $region16
        $region15: #{tpu_custom_call.1} parent=11 // pred_region
          _
        $region16: #{tpu_custom_call.1} parent=11 // pred_fallthru
          _
        // Predicated region
        $region17: #{tpu_custom_call.1} parent=11 // pred_check
          %p303 = pneg %p91
        $region18: #{tpu_custom_call.1} parent=11 // pred_check_branch
          %305 = sbr.rel (%p303) target = $region20
        $region19: #{tpu_custom_call.1} parent=11 // pred_region
          _
        $region20: #{tpu_custom_call.1} parent=11 // pred_fallthru
          _
        // Predicated region
        $region21: #{tpu_custom_call.1} parent=11 // pred_check
          %p306 = pneg %p112
        $region22: #{tpu_custom_call.1} parent=11 // pred_check_branch
          %308 = sbr.rel (%p306) target = $region24
        $region23: #{tpu_custom_call.1} parent=11 // pred_region
          _
        $region24: #{tpu_custom_call.1} parent=11 // pred_fallthru
          _
        // Predicated region
        $region25: #{tpu_custom_call.1} parent=11 // pred_check
          %p309 = pneg %p133
        $region26: #{tpu_custom_call.1} parent=11 // pred_check_branch
          %311 = sbr.rel (%p309) target = $region28
        $region27: #{tpu_custom_call.1} parent=11 // pred_region
          _
        $region28: #{tpu_custom_call.1} parent=11 // pred_fallthru
          _
        // Predicated region
        $region29: #{tpu_custom_call.1} parent=11 // pred_check
          %p312 = pneg %p154
        $region30: #{tpu_custom_call.1} parent=11 // pred_check_branch
          %314 = sbr.rel (%p312) target = $region32
        $region31: #{tpu_custom_call.1} parent=11 // pred_region
          _
        $region32: #{tpu_custom_call.1} parent=11 // pred_fallthru
          _
        // Predicated region
        $region33: #{tpu_custom_call.1} parent=11 // pred_check
          %p315 = pneg %p175
        $region34: #{tpu_custom_call.1} parent=11 // pred_check_branch
          %317 = sbr.rel (%p315) target = $region36
        $region35: #{tpu_custom_call.1} parent=11 // pred_region
          _
        $region36: #{tpu_custom_call.1} parent=11 // pred_fallthru
          _
        // Predicated region
        $region37: #{tpu_custom_call.1} parent=11 // pred_check
          %p318 = pneg %p196
        $region38: #{tpu_custom_call.1} parent=11 // pred_check_branch
          %320 = sbr.rel (%p318) target = $region40
        $region39: #{tpu_custom_call.1} parent=11 // pred_region
          _
        $region40: #{tpu_custom_call.1} parent=11 // pred_fallthru
          _
        // Predicated region
        $region41: #{tpu_custom_call.1} parent=11 // pred_check
          %p321 = pneg %p217
        $region42: #{tpu_custom_call.1} parent=11 // pred_check_branch
          %323 = sbr.rel (%p321) target = $region44
        $region43: #{tpu_custom_call.1} parent=11 // pred_region
          _
        $region44: #{tpu_custom_call.1} parent=11 // pred_fallthru
          _
        // Predicated region
        $region45: #{tpu_custom_call.1} parent=11 // pred_check
          %p324 = pneg %p238
        $region46: #{tpu_custom_call.1} parent=11 // pred_check_branch
          %326 = sbr.rel (%p324) target = $region48
        $region47: #{tpu_custom_call.1} parent=11 // pred_region
          _
        $region48: #{tpu_custom_call.1} parent=11 // pred_fallthru
          _
        // Predicated region
        $region49: #{tpu_custom_call.1} parent=11 // pred_check
          %p327 = pneg %p259
        $region50: #{tpu_custom_call.1} parent=11 // pred_check_branch
          %329 = sbr.rel (%p327) target = $region52
        $region51: #{tpu_custom_call.1} parent=11 // pred_region
          _
        $region52: #{tpu_custom_call.1} parent=11 // pred_fallthru
          _
      $region12: #{tpu_custom_call.1} parent=5 // pred_fallthru
        _
      %p330 = scmp.lt.s32.totalorder %s23, 4
      // Predicated region
      $region53: #{tpu_custom_call.1} parent=5 // pred_check
        %p331 = pneg %p330
      $region54: #{tpu_custom_call.1} parent=5 // pred_check_branch
        %333 = sbr.rel (%p331) target = $region56
      $region55: #{tpu_custom_call.1} parent=5 // pred_region
        // Predicated region
        $region57: #{tpu_custom_call.1} parent=55 // pred_check
          %p334 = pneg %p43
        $region58: #{tpu_custom_call.1} parent=55 // pred_check_branch
          %336 = sbr.rel (%p334) target = $region60
        $region59: #{tpu_custom_call.1} parent=55 // pred_region
          %s337 = sand.u32 %s33, 1
          %s338 = scalar_lea.sflag [#allocation3], %s337
          %s339 = sand.u32 %s33, 1
          %s340 = smul.addr %s339, 64
          %s341 = scalar_lea.vmem [#allocation2], %s340
          %s342 = smul.u32 8, %s23
          %344 = vsyncadd %s338, 0
          %s345 = smul.addr %s342, 8
          %s346 = scalar_lea.hbm %s0, %s345
          %s347 = sshll.u32 %s346, 4
          %s348 = int_to_ptr.hbm [resolvable:$true] %s347
          %s349 = sshll.u32 %s341, 4
          %s350 = int_to_ptr.vmem [resolvable:$true] %s349
          %355 = dma.hbm_to_vmem [thread:$0]  %s348, 1024, %s350, %s338, 128, 128, 8
        $region60: #{tpu_custom_call.1} parent=55 // pred_fallthru
          _
      $region56: #{tpu_custom_call.1} parent=5 // pred_fallthru
        _
      %p356 = scmp.le.s32.totalorder 1, %s23
      %p357 = scmp.lt.s32.totalorder %s23, 5
      %p358 = pnand %p356, %p357
      %p359 = pneg %p358
      // Predicated region
      $region61: #{tpu_custom_call.1} parent=5 // pred_check
        _
      $region62: #{tpu_custom_call.1} parent=5 // pred_check_branch
        %361 = sbr.rel (%p358) target = $region64
      $region63: #{tpu_custom_call.1} parent=5 // pred_region
        %s362 = ssub.s32 %s23, 1
        %s363 = sand.u32 %s36, 1
        %s364 = scalar_lea.sflag [#allocation3], %s363
        %s365 = sand.u32 %s36, 1
        %s366 = smul.addr %s365, 64
        %s367 = scalar_lea.vmem [#allocation2], %s366
        // Predicated region
        $region65: #{tpu_custom_call.1} parent=63 // pred_check
          %p368 = pneg %p49
        $region66: #{tpu_custom_call.1} parent=63 // pred_check_branch
          %370 = sbr.rel (%p368) target = $region68
        $region67: #{tpu_custom_call.1} parent=63 // pred_region
          %372 = dma.done %s364, 1024
        $region68: #{tpu_custom_call.1} parent=63 // pred_fallthru
          _
        %s373 = sand.u32 %s36, 1
        %s374 = scalar_lea.sflag [#allocation3], %s373
        %s375 = sand.u32 %s36, 1
        %s376 = smul.addr %s375, 64
        %s377 = scalar_lea.vmem [#allocation2], %s376
        %p378 = pneg %p49
        %p379 = pneg %p46
        %p380 = pneg %p70
        %p381 = pneg %p67
        %p382 = pneg %p91
        %p383 = pneg %p88
        %p384 = pneg %p112
        %p385 = pneg %p109
        %p386 = pneg %p133
        %p387 = pneg %p130
        %p388 = pneg %p154
        %p389 = pneg %p151
        %p390 = pneg %p175
        %p391 = pneg %p172
        %p392 = pneg %p196
        %p393 = pneg %p193
        %p394 = pneg %p217
        %p395 = pneg %p214
        %p396 = pneg %p238
        %p397 = pneg %p235
        %p398 = pneg %p259
        %p399 = pneg %p256
        %p400 = pneg %p285
        %p401 = pneg %p282
        %s402 = sand.u32 %s272, 1
        %s403 = scalar_lea.sflag [#allocation4], %s402
        %s404 = sand.u32 %s272, 1
        %s405 = smul.addr %s404, 64
        %s406 = scalar_lea.vmem [#allocation5], %s405
        %s407 = smul.u32 8, %s28
        %s408 = smul.u32 8, %s28
        %v409 = vld [vmem:[%s367] sm:$0xff]
        %v410 = vld [vmem:[%s367 + $0x8] sm:$0xff]
        %v411 = vld [vmem:[%s367 + $0x10] sm:$0xff]
        %v412 = vld [vmem:[%s367 + $0x18] sm:$0xff]
        %v413 = vld [vmem:[%s367 + $0x20] sm:$0xff]
        %v414 = vld [vmem:[%s367 + $0x28] sm:$0xff]
        %v415 = vld [vmem:[%s367 + $0x30] sm:$0xff]
        %v416 = vld [vmem:[%s367 + $0x38] sm:$0xff]
        %v417 = vld [vmem:[%s1] sm:$0xff]
        %v418 = vld [vmem:[%s1 + $0x8] sm:$0xff]
        %v419 = vld [vmem:[%s1 + $0x10] sm:$0xff]
        %v420 = vld [vmem:[%s1 + $0x18] sm:$0xff]
        %v421 = vld [vmem:[%s1 + $0x20] sm:$0xff]
        %v422 = vld [vmem:[%s1 + $0x28] sm:$0xff]
        %v423 = vld [vmem:[%s1 + $0x30] sm:$0xff]
        %v424 = vld [vmem:[%s1 + $0x38] sm:$0xff]
        %v425 = vld [vmem:[%s1 + $0x40] sm:$0xff]
        %v426 = vld [vmem:[%s1 + $0x48] sm:$0xff]
        %v427 = vld [vmem:[%s1 + $0x50] sm:$0xff]
        %v428 = vld [vmem:[%s1 + $0x58] sm:$0xff]
        %v429 = vld [vmem:[%s1 + $0x60] sm:$0xff]
        %v430 = vld [vmem:[%s1 + $0x68] sm:$0xff]
        %v431 = vld [vmem:[%s1 + $0x70] sm:$0xff]
        %v432 = vld [vmem:[%s1 + $0x78] sm:$0xff]
        %v433 = vld [vmem:[%s2] sm:$0x1]
        %v435 = vperm.slane %v433, 0
        %437 = vmatpush.msra.mxu0 %v432
        %438 = vmatpush.msra.mxu0 %v431
        %439 = vmatpush.msra.mxu0 %v430
        %440 = vmatpush.msra.mxu0 %v429
        %441 = vmatpush.msra.mxu0 %v428
        %442 = vmatpush.msra.mxu0 %v427
        %443 = vmatpush.msra.mxu0 %v426
        %444 = vmatpush.msra.mxu0 %v425
        %445 = vmatpush.msra.mxu0 %v424
        %446 = vmatpush.msra.mxu0 %v423
        %447 = vmatpush.msra.mxu0 %v422
        %448 = vmatpush.msra.mxu0 %v421
        %449 = vmatpush.msra.mxu0 %v420
        %450 = vmatpush.msra.mxu0 %v419
        %451 = vmatpush.msra.mxu0 %v418
        %452 = vmatpush.msra.mxu0 %v417
        %453 = vmatmul.f32.gmra.mxu0 %v409
        %v454 = vpop.f32.mrf.mxu0
        %v455 = vadd.f32 %v435, %v454
        %456 = vmatmul.f32.gmra.mxu0 %v410
        %v457 = vpop.f32.mrf.mxu0
        %v458 = vadd.f32 %v435, %v457
        %459 = vmatmul.f32.gmra.mxu0 %v411
        %v460 = vpop.f32.mrf.mxu0
        %v461 = vadd.f32 %v435, %v460
        %462 = vmatmul.f32.gmra.mxu0 %v412
        %v463 = vpop.f32.mrf.mxu0
        %v464 = vadd.f32 %v435, %v463
        %465 = vmatmul.f32.gmra.mxu0 %v413
        %v466 = vpop.f32.mrf.mxu0
        %v467 = vadd.f32 %v435, %v466
        %468 = vmatmul.f32.gmra.mxu0 %v414
        %v469 = vpop.f32.mrf.mxu0
        %v470 = vadd.f32 %v435, %v469
        %471 = vmatmul.f32.gmra.mxu0 %v415
        %v472 = vpop.f32.mrf.mxu0
        %v473 = vadd.f32 %v435, %v472
        %474 = vmatmul.f32.gmra.mxu0 %v416
        %v475 = vpop.f32.mrf.mxu0
        %v476 = vadd.f32 %v435, %v475
        %477 = vdwg.mxu0
        %v478 = vmax.f32 %v455, 0.0
        %v479 = vmax.f32 %v458, 0.0
        %v480 = vmax.f32 %v461, 0.0
        %v481 = vmax.f32 %v464, 0.0
        %v482 = vmax.f32 %v467, 0.0
        %v483 = vmax.f32 %v470, 0.0
        %v484 = vmax.f32 %v473, 0.0
        %v485 = vmax.f32 %v476, 0.0
        %v486 = vld [vmem:[%s3] sm:$0xff]
        %v487 = vld [vmem:[%s3 + $0x8] sm:$0xff]
        %v488 = vld [vmem:[%s3 + $0x10] sm:$0xff]
        %v489 = vld [vmem:[%s3 + $0x18] sm:$0xff]
        %v490 = vld [vmem:[%s3 + $0x20] sm:$0xff]
        %v491 = vld [vmem:[%s3 + $0x28] sm:$0xff]
        %v492 = vld [vmem:[%s3 + $0x30] sm:$0xff]
        %v493 = vld [vmem:[%s3 + $0x38] sm:$0xff]
        %v494 = vld [vmem:[%s4] sm:$0x1]
        %v496 = vperm.slane %v494, 0
        %vm498 = vcmask 523264
        %v500 = vsel %vm498, %v478, 0
        %v503 = vsel %vm498, %v479, 0
        %v506 = vsel %vm498, %v480, 0
        %v509 = vsel %vm498, %v481, 0
        %v512 = vsel %vm498, %v482, 0
        %v515 = vsel %vm498, %v483, 0
        %v518 = vsel %vm498, %v484, 0
        %v521 = vsel %vm498, %v485, 0
        %523 = vmatpush.msra.mxu0 0.0
        %524 = vmatpush.msra.mxu0 0.0
        %525 = vmatpush.msra.mxu0 0.0
        %526 = vmatpush.msra.mxu0 0.0
        %527 = vmatpush.msra.mxu0 0.0
        %528 = vmatpush.msra.mxu0 0.0
        %529 = vmatpush.msra.mxu0 0.0
        %530 = vmatpush.msra.mxu0 0.0
        %531 = vmatpush.msra.mxu0 %v493
        %532 = vmatpush.msra.mxu0 %v492
        %533 = vmatpush.msra.mxu0 %v491
        %534 = vmatpush.msra.mxu0 %v490
        %535 = vmatpush.msra.mxu0 %v489
        %536 = vmatpush.msra.mxu0 %v488
        %537 = vmatpush.msra.mxu0 %v487
        %538 = vmatpush.msra.mxu0 %v486
        %539 = vmatmul.f32.gmra.mxu0 %v500
        %v540 = vpop.f32.mrf.mxu0
        %v541 = vadd.f32 %v496, %v540
        %542 = vmatmul.f32.gmra.mxu0 %v503
        %v543 = vpop.f32.mrf.mxu0
        %v544 = vadd.f32 %v496, %v543
        %545 = vmatmul.f32.gmra.mxu0 %v506
        %v546 = vpop.f32.mrf.mxu0
        %v547 = vadd.f32 %v496, %v546
        %548 = vmatmul.f32.gmra.mxu0 %v509
        %v549 = vpop.f32.mrf.mxu0
        %v550 = vadd.f32 %v496, %v549
        %551 = vmatmul.f32.gmra.mxu0 %v512
        %v552 = vpop.f32.mrf.mxu0
        %v553 = vadd.f32 %v496, %v552
        %554 = vmatmul.f32.gmra.mxu0 %v515
        %v555 = vpop.f32.mrf.mxu0
        %v556 = vadd.f32 %v496, %v555
        %557 = vmatmul.f32.gmra.mxu0 %v518
        %v558 = vpop.f32.mrf.mxu0
        %v559 = vadd.f32 %v496, %v558
        %560 = vmatmul.f32.gmra.mxu0 %v521
        %v561 = vpop.f32.mrf.mxu0
        %v562 = vadd.f32 %v496, %v561
        %563 = vdwg.mxu0
        %v564 = vmax.f32 %v541, 0.0
        %v565 = vmax.f32 %v544, 0.0
        %v566 = vmax.f32 %v547, 0.0
        %v567 = vmax.f32 %v550, 0.0
        %v568 = vmax.f32 %v553, 0.0
        %v569 = vmax.f32 %v556, 0.0
        %v570 = vmax.f32 %v559, 0.0
        %v571 = vmax.f32 %v562, 0.0
        %v572 = vld [vmem:[%s5] sm:$0xff]
        %v573 = vld [vmem:[%s5 + $0x8] sm:$0xff]
        %v574 = vld [vmem:[%s5 + $0x10] sm:$0xff]
        %v575 = vld [vmem:[%s5 + $0x18] sm:$0xff]
        %v576 = vld [vmem:[%s6] sm:$0x1]
        %v578 = vperm.slane %v576, 0
        %vm580 = vcmask 261120
        %v582 = vsel %vm580, %v564, 0
        %v585 = vsel %vm580, %v565, 0
        %v588 = vsel %vm580, %v566, 0
        %v591 = vsel %vm580, %v567, 0
        %v594 = vsel %vm580, %v568, 0
        %v597 = vsel %vm580, %v569, 0
        %v600 = vsel %vm580, %v570, 0
        %v603 = vsel %vm580, %v571, 0
        %605 = vmatpush.msra.mxu0 0.0
        %606 = vmatpush.msra.mxu0 0.0
        %607 = vmatpush.msra.mxu0 0.0
        %608 = vmatpush.msra.mxu0 0.0
        %609 = vmatpush.msra.mxu0 0.0
        %610 = vmatpush.msra.mxu0 0.0
        %611 = vmatpush.msra.mxu0 0.0
        %612 = vmatpush.msra.mxu0 0.0
        %613 = vmatpush.msra.mxu0 0.0
        %614 = vmatpush.msra.mxu0 0.0
        %615 = vmatpush.msra.mxu0 0.0
        %616 = vmatpush.msra.mxu0 0.0
        %617 = vmatpush.msra.mxu0 %v575
        %618 = vmatpush.msra.mxu0 %v574
        %619 = vmatpush.msra.mxu0 %v573
        %620 = vmatpush.msra.mxu0 %v572
        %621 = vmatmul.f32.gmra.mxu0 %v582
        %v622 = vpop.f32.mrf.mxu0
        %v623 = vadd.f32 %v578, %v622
        %624 = vmatmul.f32.gmra.mxu0 %v585
        %v625 = vpop.f32.mrf.mxu0
        %v626 = vadd.f32 %v578, %v625
        %627 = vmatmul.f32.gmra.mxu0 %v588
        %v628 = vpop.f32.mrf.mxu0
        %v629 = vadd.f32 %v578, %v628
        %630 = vmatmul.f32.gmra.mxu0 %v591
        %v631 = vpop.f32.mrf.mxu0
        %v632 = vadd.f32 %v578, %v631
        %633 = vmatmul.f32.gmra.mxu0 %v594
        %v634 = vpop.f32.mrf.mxu0
        %v635 = vadd.f32 %v578, %v634
        %636 = vmatmul.f32.gmra.mxu0 %v597
        %v637 = vpop.f32.mrf.mxu0
        %v638 = vadd.f32 %v578, %v637
        %639 = vmatmul.f32.gmra.mxu0 %v600
        %v640 = vpop.f32.mrf.mxu0
        %v641 = vadd.f32 %v578, %v640
        %642 = vmatmul.f32.gmra.mxu0 %v603
        %v643 = vpop.f32.mrf.mxu0
        %v644 = vadd.f32 %v578, %v643
        %645 = vdwg.mxu0
        %v646 = vmax.f32 %v623, 0.0
        %v647 = vmax.f32 %v626, 0.0
        %v648 = vmax.f32 %v629, 0.0
        %v649 = vmax.f32 %v632, 0.0
        %v650 = vmax.f32 %v635, 0.0
        %v651 = vmax.f32 %v638, 0.0
        %v652 = vmax.f32 %v641, 0.0
        %v653 = vmax.f32 %v644, 0.0
        %v654 = vld [vmem:[%s7] sm:$0xff]
        %v655 = vld [vmem:[%s7 + $0x8] sm:$0xff]
        %v656 = vld [vmem:[%s7 + $0x10] sm:$0xff]
        %v657 = vld [vmem:[%s7 + $0x18] sm:$0xff]
        %v658 = vld [vmem:[%s8] sm:$0x1]
        %v660 = vperm.slane %v658, 0
        %v663 = vsel %vm580, %v646, 0
        %v666 = vsel %vm580, %v647, 0
        %v669 = vsel %vm580, %v648, 0
        %v672 = vsel %vm580, %v649, 0
        %v675 = vsel %vm580, %v650, 0
        %v678 = vsel %vm580, %v651, 0
        %v681 = vsel %vm580, %v652, 0
        %v684 = vsel %vm580, %v653, 0
        %686 = vmatpush.msra.mxu0 0.0
        %687 = vmatpush.msra.mxu0 0.0
        %688 = vmatpush.msra.mxu0 0.0
        %689 = vmatpush.msra.mxu0 0.0
        %690 = vmatpush.msra.mxu0 0.0
        %691 = vmatpush.msra.mxu0 0.0
        %692 = vmatpush.msra.mxu0 0.0
        %693 = vmatpush.msra.mxu0 0.0
        %694 = vmatpush.msra.mxu0 0.0
        %695 = vmatpush.msra.mxu0 0.0
        %696 = vmatpush.msra.mxu0 0.0
        %697 = vmatpush.msra.mxu0 0.0
        %698 = vmatpush.msra.mxu0 %v657
        %699 = vmatpush.msra.mxu0 %v656
        %700 = vmatpush.msra.mxu0 %v655
        %701 = vmatpush.msra.mxu0 %v654
        %702 = vmatmul.f32.gmra.mxu0 %v663
        %v703 = vpop.f32.mrf.mxu0
        %v704 = vadd.f32 %v660, %v703
        %705 = vmatmul.f32.gmra.mxu0 %v666
        %v706 = vpop.f32.mrf.mxu0
        %v707 = vadd.f32 %v660, %v706
        %708 = vmatmul.f32.gmra.mxu0 %v669
        %v709 = vpop.f32.mrf.mxu0
        %v710 = vadd.f32 %v660, %v709
        %711 = vmatmul.f32.gmra.mxu0 %v672
        %v712 = vpop.f32.mrf.mxu0
        %v713 = vadd.f32 %v660, %v712
        %714 = vmatmul.f32.gmra.mxu0 %v675
        %v715 = vpop.f32.mrf.mxu0
        %v716 = vadd.f32 %v660, %v715
        %717 = vmatmul.f32.gmra.mxu0 %v678
        %v718 = vpop.f32.mrf.mxu0
        %v719 = vadd.f32 %v660, %v718
        %720 = vmatmul.f32.gmra.mxu0 %v681
        %v721 = vpop.f32.mrf.mxu0
        %v722 = vadd.f32 %v660, %v721
        %723 = vmatmul.f32.gmra.mxu0 %v684
        %v724 = vpop.f32.mrf.mxu0
        %v725 = vadd.f32 %v660, %v724
        %726 = vdwg.mxu0
        %v727 = vmax.f32 %v704, 0.0
        %v728 = vmax.f32 %v707, 0.0
        %v729 = vmax.f32 %v710, 0.0
        %v730 = vmax.f32 %v713, 0.0
        %v731 = vmax.f32 %v716, 0.0
        %v732 = vmax.f32 %v719, 0.0
        %v733 = vmax.f32 %v722, 0.0
        %v734 = vmax.f32 %v725, 0.0
        %v735 = vld [vmem:[%s9] sm:$0xff]
        %v736 = vld [vmem:[%s9 + $0x8] sm:$0xff]
        %v737 = vld [vmem:[%s9 + $0x10] sm:$0xff]
        %v738 = vld [vmem:[%s9 + $0x18] sm:$0xff]
        %v739 = vld [vmem:[%s9 + $0x20] sm:$0xff]
        %v740 = vld [vmem:[%s9 + $0x28] sm:$0xff]
        %v741 = vld [vmem:[%s9 + $0x30] sm:$0xff]
        %v742 = vld [vmem:[%s9 + $0x38] sm:$0xff]
        %v743 = vld [vmem:[%s10] sm:$0x1]
        %v745 = vperm.slane %v743, 0
        %v748 = vsel %vm498, %v727, 0
        %v751 = vsel %vm498, %v728, 0
        %v754 = vsel %vm498, %v729, 0
        %v757 = vsel %vm498, %v730, 0
        %v760 = vsel %vm498, %v731, 0
        %v763 = vsel %vm498, %v732, 0
        %v766 = vsel %vm498, %v733, 0
        %v769 = vsel %vm498, %v734, 0
        %771 = vmatpush.msra.mxu0 0.0
        %772 = vmatpush.msra.mxu0 0.0
        %773 = vmatpush.msra.mxu0 0.0
        %774 = vmatpush.msra.mxu0 0.0
        %775 = vmatpush.msra.mxu0 0.0
        %776 = vmatpush.msra.mxu0 0.0
        %777 = vmatpush.msra.mxu0 0.0
        %778 = vmatpush.msra.mxu0 0.0
        %779 = vmatpush.msra.mxu0 %v742
        %780 = vmatpush.msra.mxu0 %v741
        %781 = vmatpush.msra.mxu0 %v740
        %782 = vmatpush.msra.mxu0 %v739
        %783 = vmatpush.msra.mxu0 %v738
        %784 = vmatpush.msra.mxu0 %v737
        %785 = vmatpush.msra.mxu0 %v736
        %786 = vmatpush.msra.mxu0 %v735
        %787 = vmatmul.f32.gmra.mxu0 %v748
        %v788 = vpop.f32.mrf.mxu0
        %v789 = vadd.f32 %v745, %v788
        %790 = vmatmul.f32.gmra.mxu0 %v751
        %v791 = vpop.f32.mrf.mxu0
        %v792 = vadd.f32 %v745, %v791
        %793 = vmatmul.f32.gmra.mxu0 %v754
        %v794 = vpop.f32.mrf.mxu0
        %v795 = vadd.f32 %v745, %v794
        %796 = vmatmul.f32.gmra.mxu0 %v757
        %v797 = vpop.f32.mrf.mxu0
        %v798 = vadd.f32 %v745, %v797
        %799 = vmatmul.f32.gmra.mxu0 %v760
        %v800 = vpop.f32.mrf.mxu0
        %v801 = vadd.f32 %v745, %v800
        %802 = vmatmul.f32.gmra.mxu0 %v763
        %v803 = vpop.f32.mrf.mxu0
        %v804 = vadd.f32 %v745, %v803
        %805 = vmatmul.f32.gmra.mxu0 %v766
        %v806 = vpop.f32.mrf.mxu0
        %v807 = vadd.f32 %v745, %v806
        %808 = vmatmul.f32.gmra.mxu0 %v769
        %v809 = vpop.f32.mrf.mxu0
        %v810 = vadd.f32 %v745, %v809
        %811 = vdwg.mxu0
        %v812 = vsub.f32 0.0, %v789
        %v813 = vsub.f32 0.0, %v792
        %v814 = vsub.f32 0.0, %v795
        %v815 = vsub.f32 0.0, %v798
        %v816 = vsub.f32 0.0, %v801
        %v817 = vsub.f32 0.0, %v804
        %v818 = vsub.f32 0.0, %v807
        %v819 = vsub.f32 0.0, %v810
        %v820 = vmul.f32 %v812, 1.442695
        %v821 = vpow.pop %v820
        %v822 = vmul.f32 %v813, 1.442695
        %v823 = vpow.pop %v822
        %v824 = vmul.f32 %v814, 1.442695
        %v825 = vpow.pop %v824
        %v826 = vmul.f32 %v815, 1.442695
        %v827 = vpow.pop %v826
        %v828 = vmul.f32 %v816, 1.442695
        %v829 = vpow.pop %v828
        %v830 = vmul.f32 %v817, 1.442695
        %v831 = vpow.pop %v830
        %v832 = vmul.f32 %v818, 1.442695
        %v833 = vpow.pop %v832
        %v834 = vmul.f32 %v819, 1.442695
        %v835 = vpow.pop %v834
        %v836 = vadd.f32 %v821, 1.0
        %v837 = vadd.f32 %v823, 1.0
        %v838 = vadd.f32 %v825, 1.0
        %v839 = vadd.f32 %v827, 1.0
        %v840 = vadd.f32 %v829, 1.0
        %v841 = vadd.f32 %v831, 1.0
        %v842 = vadd.f32 %v833, 1.0
        %v843 = vadd.f32 %v835, 1.0
        %v844 = vrcp.pop %v836
        %v845 = vmul.f32 %v836, %v844
        %v846 = vsub.f32 1.0, %v845
        %v847 = vmul.f32 %v844, %v846
        %v848 = vadd.f32 %v844, %v847
        %vm849 = vweird.f32 %v836
        %vm850 = vweird.f32 %v844
        %vm851 = vmor %vm849, %vm850
        %v852 = vsel %vm851, %v844, %v848
        %v853 = vand.u32 2147483647, %v836
        %vm854 = vcmp.eq.f32.partialorder %v853, 8.507059e+37
        %v855 = vand.u32 %v836, 2147483648
        %v856 = vor.u32 1.1754944e-38, %v855
        %v857 = vsel %vm854, %v856, %v852
        %v858 = vrcp.pop %v837
        %v859 = vmul.f32 %v837, %v858
        %v860 = vsub.f32 1.0, %v859
        %v861 = vmul.f32 %v858, %v860
        %v862 = vadd.f32 %v858, %v861
        %vm863 = vweird.f32 %v837
        %vm864 = vweird.f32 %v858
        %vm865 = vmor %vm863, %vm864
        %v866 = vsel %vm865, %v858, %v862
        %v867 = vand.u32 2147483647, %v837
        %vm868 = vcmp.eq.f32.partialorder %v867, 8.507059e+37
        %v869 = vand.u32 %v837, 2147483648
        %v870 = vor.u32 1.1754944e-38, %v869
        %v871 = vsel %vm868, %v870, %v866
        %v872 = vrcp.pop %v838
        %v873 = vmul.f32 %v838, %v872
        %v874 = vsub.f32 1.0, %v873
        %v875 = vmul.f32 %v872, %v874
        %v876 = vadd.f32 %v872, %v875
        %vm877 = vweird.f32 %v838
        %vm878 = vweird.f32 %v872
        %vm879 = vmor %vm877, %vm878
        %v880 = vsel %vm879, %v872, %v876
        %v881 = vand.u32 2147483647, %v838
        %vm882 = vcmp.eq.f32.partialorder %v881, 8.507059e+37
        %v883 = vand.u32 %v838, 2147483648
        %v884 = vor.u32 1.1754944e-38, %v883
        %v885 = vsel %vm882, %v884, %v880
        %v886 = vrcp.pop %v839
        %v887 = vmul.f32 %v839, %v886
        %v888 = vsub.f32 1.0, %v887
        %v889 = vmul.f32 %v886, %v888
        %v890 = vadd.f32 %v886, %v889
        %vm891 = vweird.f32 %v839
        %vm892 = vweird.f32 %v886
        %vm893 = vmor %vm891, %vm892
        %v894 = vsel %vm893, %v886, %v890
        %v895 = vand.u32 2147483647, %v839
        %vm896 = vcmp.eq.f32.partialorder %v895, 8.507059e+37
        %v897 = vand.u32 %v839, 2147483648
        %v898 = vor.u32 1.1754944e-38, %v897
        %v899 = vsel %vm896, %v898, %v894
        %v900 = vrcp.pop %v840
        %v901 = vmul.f32 %v840, %v900
        %v902 = vsub.f32 1.0, %v901
        %v903 = vmul.f32 %v900, %v902
        %v904 = vadd.f32 %v900, %v903
        %vm905 = vweird.f32 %v840
        %vm906 = vweird.f32 %v900
        %vm907 = vmor %vm905, %vm906
        %v908 = vsel %vm907, %v900, %v904
        %v909 = vand.u32 2147483647, %v840
        %vm910 = vcmp.eq.f32.partialorder %v909, 8.507059e+37
        %v911 = vand.u32 %v840, 2147483648
        %v912 = vor.u32 1.1754944e-38, %v911
        %v913 = vsel %vm910, %v912, %v908
        %v914 = vrcp.pop %v841
        %v915 = vmul.f32 %v841, %v914
        %v916 = vsub.f32 1.0, %v915
        %v917 = vmul.f32 %v914, %v916
        %v918 = vadd.f32 %v914, %v917
        %vm919 = vweird.f32 %v841
        %vm920 = vweird.f32 %v914
        %vm921 = vmor %vm919, %vm920
        %v922 = vsel %vm921, %v914, %v918
        %v923 = vand.u32 2147483647, %v841
        %vm924 = vcmp.eq.f32.partialorder %v923, 8.507059e+37
        %v925 = vand.u32 %v841, 2147483648
        %v926 = vor.u32 1.1754944e-38, %v925
        %v927 = vsel %vm924, %v926, %v922
        %v928 = vrcp.pop %v842
        %v929 = vmul.f32 %v842, %v928
        %v930 = vsub.f32 1.0, %v929
        %v931 = vmul.f32 %v928, %v930
        %v932 = vadd.f32 %v928, %v931
        %vm933 = vweird.f32 %v842
        %vm934 = vweird.f32 %v928
        %vm935 = vmor %vm933, %vm934
        %v936 = vsel %vm935, %v928, %v932
        %v937 = vand.u32 2147483647, %v842
        %vm938 = vcmp.eq.f32.partialorder %v937, 8.507059e+37
        %v939 = vand.u32 %v842, 2147483648
        %v940 = vor.u32 1.1754944e-38, %v939
        %v941 = vsel %vm938, %v940, %v936
        %v942 = vrcp.pop %v843
        %v943 = vmul.f32 %v843, %v942
        %v944 = vsub.f32 1.0, %v943
        %v945 = vmul.f32 %v942, %v944
        %v946 = vadd.f32 %v942, %v945
        %vm947 = vweird.f32 %v843
        %vm948 = vweird.f32 %v942
        %vm949 = vmor %vm947, %vm948
        %v950 = vsel %vm949, %v942, %v946
        %v951 = vand.u32 2147483647, %v843
        %vm952 = vcmp.eq.f32.partialorder %v951, 8.507059e+37
        %v953 = vand.u32 %v843, 2147483648
        %v954 = vor.u32 1.1754944e-38, %v953
        %v955 = vsel %vm952, %v954, %v950
        %956 = vst [vmem:[%s406] sm:$0xff] %v857
        %957 = vst [vmem:[%s406 + $0x8] sm:$0xff] %v871
        %958 = vst [vmem:[%s406 + $0x10] sm:$0xff] %v885
        %959 = vst [vmem:[%s406 + $0x18] sm:$0xff] %v899
        %960 = vst [vmem:[%s406 + $0x20] sm:$0xff] %v913
        %961 = vst [vmem:[%s406 + $0x28] sm:$0xff] %v927
        %962 = vst [vmem:[%s406 + $0x30] sm:$0xff] %v941
        %963 = vst [vmem:[%s406 + $0x38] sm:$0xff] %v955
        %s964 = sand.u32 %s272, 1
        %s965 = scalar_lea.sflag [#allocation4], %s964
        %s966 = sand.u32 %s272, 1
        %s967 = smul.addr %s966, 64
        %s968 = scalar_lea.vmem [#allocation5], %s967
        // Predicated region
        $region69: #{tpu_custom_call.1} parent=63 // pred_check
          %p969 = pneg %p282
        $region70: #{tpu_custom_call.1} parent=63 // pred_check_branch
          %971 = sbr.rel (%p969) target = $region72
        $region71: #{tpu_custom_call.1} parent=63 // pred_region
          %s972 = smul.u32 8, %s28
          %974 = vsyncadd %s965, 0
          %s975 = smul.addr %s972, 8
          %s976 = scalar_lea.hbm %s11, %s975
          %s977 = sshll.u32 %s968, 4
          %s978 = int_to_ptr.vmem [resolvable:$true] %s977
          %s979 = sshll.u32 %s976, 4
          %s980 = int_to_ptr.hbm [resolvable:$true] %s979
          %985 = dma.vmem_to_hbm [thread:$0]  %s978, 1024, %s980, %s965, 128, 128, 8
        $region72: #{tpu_custom_call.1} parent=63 // pred_fallthru
          _
      $region64: #{tpu_custom_call.1} parent=5 // pred_fallthru
        _
      %p986 = scmp.le.s32.totalorder 2, %s23
      // Predicated region
      $region73: #{tpu_custom_call.1} parent=5 // pred_check
        %p987 = pneg %p986
      $region74: #{tpu_custom_call.1} parent=5 // pred_check_branch
        %989 = sbr.rel (%p987) target = $region76
      $region75: #{tpu_custom_call.1} parent=5 // pred_region
        %s990 = ssub.s32 %s23, 2
        // Predicated region
        $region77: #{tpu_custom_call.1} parent=75 // pred_check
          %p991 = pneg %p288
        $region78: #{tpu_custom_call.1} parent=75 // pred_check_branch
          %993 = sbr.rel (%p991) target = $region80
        $region79: #{tpu_custom_call.1} parent=75 // pred_region
          %s994 = sand.u32 %s273, 1
          %s995 = scalar_lea.sflag [#allocation4], %s994
          %s996 = sand.u32 %s273, 1
          %s997 = smul.addr %s996, 64
          %s998 = scalar_lea.vmem [#allocation5], %s997
          %1000 = dma.done %s995, 1024
        $region80: #{tpu_custom_call.1} parent=75 // pred_fallthru
          _
      $region76: #{tpu_custom_call.1} parent=5 // pred_fallthru
        _
    $region6: #{tpu_custom_call.1} parent=1 // loop_footer
      %s27 = sadd.s32 1, %s23
    $region7: #{tpu_custom_call.1} parent=1 // loop_footer_branch
      %22 = sbr.rel target = $region3
    $region8: #{tpu_custom_call.1} parent=1 // loop_exit
      _
    %1001 = vsyncpa [#allocation3], 1
    %s1002 = scalar_lea.sflag [#allocation3], 1
    %1003 = vsyncpa %s1002, 1
    %1004 = vsyncpa [#allocation4], 1
    %s1005 = scalar_lea.sflag [#allocation4], 1
    %1006 = vsyncpa %s1005, 1

</llo_original>
